<compile_context>
chip_gen: v7x
topology: tpu7x:2x2x1
jax: 0.10.0
libtpu: 0.0.40
codegen_flags: <defaults>
</compile_context>

<pallas_src>
import jax
import jax.numpy as jnp
from jax.experimental import pallas as pl
from jax.experimental.pallas import tpu as pltpu


def _vmem_limit_bytes(need_bytes):
    # Generous headroom, but stay safely under v7x's 64 MiB physical VMEM.
    return int(min(max(3 * need_bytes, 32 * 1024 * 1024), 48 * 1024 * 1024))


# ----------------------------------------------------------------------------
# Prologue: Chebyshev polynomial stack T_1 .. T_{K-1}  (batch independent)
# ----------------------------------------------------------------------------
def _cheb_poly_kernel(l_ref, t_ref, s_ref):
    """Single grid point.
    l_ref: [N, N] f32 laplacian;  t_ref: [K-1, N, N] bf16 output stack;
    s_ref: [2, N, N] f32 ping-pong scratch carrying T_{k-1}, T_{k-2}."""
    k_hi = t_ref.shape[0]                       # == K - 1 (static)
    n = l_ref.shape[0]

    # T_1 = L
    t_ref[0] = l_ref[...].astype(t_ref.dtype)

    if k_hi >= 2:
        rows = jax.lax.broadcasted_iota(jnp.int32, (n, n), 0)
        cols = jax.lax.broadcasted_iota(jnp.int32, (n, n), 1)
        s_ref[0] = (rows == cols).astype(jnp.float32)   # T_0 = I  (slot 0)
        s_ref[1] = l_ref[...]                           # T_1 = L  (slot 1)
        for k in range(2, k_hi + 1):                    # static unroll (K small)
            slot = k & 1                                # T_k overwrites T_{k-2}
            t_new = (2.0 * jnp.dot(l_ref[...], s_ref[1 - slot],
                                   preferred_element_type=jnp.float32)
                     - s_ref[slot])
            s_ref[slot] = t_new
            t_ref[k - 1] = t_new.astype(t_ref.dtype)


def _cheb_poly_stack(L, K):
    N = L.shape[0]
    need = N * N * 4 + (K - 1) * N * N * 2 + 2 * N * N * 4
    return pl.pallas_call(
        _cheb_poly_kernel,
        out_shape=jax.ShapeDtypeStruct((K - 1, N, N), jnp.bfloat16),
        grid=(1,),
        in_specs=[pl.BlockSpec((N, N), lambda i: (0, 0))],
        out_specs=pl.BlockSpec((K - 1, N, N), lambda i: (0, 0, 0)),
        scratch_shapes=[pltpu.VMEM((2, N, N), jnp.float32)],
        compiler_params=pltpu.CompilerParams(
            dimension_semantics=("arbitrary",),
            vmem_limit_bytes=_vmem_limit_bytes(need)),
    )(L)


# ----------------------------------------------------------------------------
# Main kernel: per-batch propagation + fused feature transform
# ----------------------------------------------------------------------------
def _chebconv_kernel(t_ref, x_ref, w_ref, b_ref, o_ref, p_ref):
    """Grid = (B,).
    t_ref: [K-1, N, N] bf16;  x_ref: [1, N, C] f32;  w_ref: [K*C, D] f32;
    b_ref: [1, D] f32;  o_ref: [1, N, D] f32;
    p_ref: [N, K*C] bf16 scratch holding [x | T_1 x | ... | T_{K-1} x]."""
    c = x_ref.shape[-1]
    k_hi = t_ref.shape[0]                       # == K - 1 (static)

    x_bf = x_ref[0].astype(jnp.bfloat16)
    p_ref[:, :c] = x_bf                         # T_0 @ x == x (identity skipped)
    for k in range(k_hi):                       # static unroll over K-1
        p_ref[:, (k + 1) * c:(k + 2) * c] = jnp.dot(
            t_ref[k], x_bf, preferred_element_type=jnp.float32
        ).astype(jnp.bfloat16)

    # One lane-denser matmul replaces K separate [N,C]@[C,D] matmuls.
    acc = jnp.dot(p_ref[...], w_ref[...].astype(jnp.bfloat16),
                  preferred_element_type=jnp.float32)   # [N, D] f32 accumulate
    o_ref[0] = (acc + b_ref[...]).astype(o_ref.dtype)


def chebconv_forward(x, graph, weight, bias, normalize=True):
    """x: [B, N, C_in] f32, graph: [N, N] f32,
    weight: [K, C_in, C_out] f32 (PyTorch [K,1,C_in,C_out] squeezed),
    bias: [1, C_out] f32 -> [B, N, C_out] f32."""
    B, N, C = x.shape
    K, _, D = weight.shape

    # --- glue: graph Laplacian setup (one-off, tiny; same semantics as the
    # PyTorch module, including inf for isolated nodes when normalize=True) ---
    graph = graph.astype(jnp.float32)
    if normalize:
        d = jnp.sum(graph, axis=-1) ** (-0.5)
        L = jnp.eye(N, dtype=jnp.float32) - (d[:, None] * graph) * d[None, :]
    else:
        L = jnp.diag(jnp.sum(graph, axis=-1)) - graph
    L = L.astype(jnp.float32)

    if K < 2:
        # Degenerate order-0 case: only T_0 = I contributes.
        return jnp.matmul(x.astype(jnp.float32), weight[0]) + bias[None]

    # Batch-independent Chebyshev stack, computed once.
    t_stack = _cheb_poly_stack(L, K)                       # [K-1, N, N] bf16
    # Layout plumbing in glue: stack W_k rows so sum_k P_k@W_k = P_cat @ W_flat.
    w_flat = weight.reshape(K * C, D).astype(jnp.float32)  # [K*C_in, C_out]

    need = 2 * ((K - 1) * N * N * 2 + N * C * 4 + K * C * D * 4
                + D * 4 + N * D * 4) + N * K * C * 2
    return pl.pallas_call(
        _chebconv_kernel,
        out_shape=jax.ShapeDtypeStruct((B, N, D), jnp.float32),
        grid=(B,),
        in_specs=[
            pl.BlockSpec((K - 1, N, N), lambda b: (0, 0, 0)),   # T_1..T_{K-1}
            pl.BlockSpec((1, N, C), lambda b: (b, 0, 0)),       # x_b
            pl.BlockSpec((K * C, D), lambda b: (0, 0)),         # W (flattened)
            pl.BlockSpec((1, D), lambda b: (0, 0)),             # bias
        ],
        out_specs=pl.BlockSpec((1, N, D), lambda b: (b, 0, 0)),
        scratch_shapes=[pltpu.VMEM((N, K * C), jnp.bfloat16)],
        compiler_params=pltpu.CompilerParams(
            dimension_semantics=("parallel",),       # v7x: shard B over 2 TCs
            vmem_limit_bytes=_vmem_limit_bytes(need)),
    )(t_stack, x.astype(jnp.float32), w_flat, bias.astype(jnp.float32))


def chebconv_reference(x, graph, weight, bias, normalize=True):
    """Pure-JAX reference mirroring the PyTorch module."""
    N = graph.shape[0]
    if normalize:
        d = jnp.sum(graph, axis=-1) ** (-0.5)
        L = jnp.eye(N, dtype=jnp.float32) - (d[:, None] * graph) * d[None, :]
    else:
        L = jnp.diag(jnp.sum(graph, axis=-1)) - graph
    K = weight.shape[0]
    polys = [jnp.eye(N, dtype=jnp.float32)]
    if K > 1:
        polys.append(L)
    for k in range(2, K):
        polys.append(2.0 * (L @ polys[k - 1]) - polys[k - 2])
    mul_L = jnp.stack(polys)[:, None]                       # [K, 1, N, N]
    result = jnp.matmul(mul_L, x[None])                     # [K, B, N, C_in]
    result = jnp.matmul(result, weight[:, None])            # [K, B, N, C_out]
    return jnp.sum(result, axis=0) + bias[None]             # [B, N, C_out]


if __name__ == "__main__":
    key = jax.random.PRNGKey(0)
    kx, kg, kw = jax.random.split(key, 3)

    B, N, C_in, C_out, K_order = 2, 16, 8, 16, 3
    K = K_order + 1

    x = jax.random.normal(kx, (B, N, C_in), dtype=jnp.float32)
    # Positive adjacency with zero diagonal (no self loops), so row sums > 0.
    graph = jax.random.uniform(kg, (N, N), dtype=jnp.float32, minval=0.1, maxval=1.0)
    graph = graph * (1.0 - jnp.eye(N, dtype=jnp.float32))

    # Deterministic xavier_normal_-style init for weight [K, 1, C_in, C_out]
    # -> squeezed to [K, C_in, C_out]; bias initialized to zeros.
    fan_in = 1 * C_in * C_out
    fan_out = K * C_in * C_out
    std = (2.0 / (fan_in + fan_out)) ** 0.5
    weight = std * jax.random.normal(kw, (K, C_in, C_out), dtype=jnp.float32)
    bias = jnp.zeros((1, C_out), dtype=jnp.float32)

    out = chebconv_forward(x, graph, weight, bias, normalize=True)
    out = jax.block_until_ready(out)

    ref = chebconv_reference(x, graph, weight, bias, normalize=True)
    assert out.shape == (B, N, C_out)
    assert jnp.allclose(out, ref, rtol=2e-2, atol=2e-2), "mismatch vs reference"

    print("KERNEL_OK")
</pallas_src>

<mosaic_0001>
module attributes {stable_mosaic.version = 11 : i64} {
  func.func @_cheb_poly_kernel(%arg0: i32, %arg1: memref<16x16xf32, #tpu.memory_space<vmem>>, %arg2: memref<3x16x16xbf16, #tpu.memory_space<vmem>>, %arg3: memref<2x16x16xf32, #tpu.memory_space<vmem>>) attributes {dimension_semantics = [#tpu.dimension_semantics<arbitrary>], iteration_bounds = array<i64: 1>, scalar_prefetch = 0 : i64, scratch_operands = 1 : i64, tpu.core_type = #tpu.core_type<tc>, window_params = [{pipeline_mode = #tpu.pipeline_mode<synchronous>, transform_indices = @transform_0, window_bounds = array<i64: 16, 16>}, {pipeline_mode = #tpu.pipeline_mode<synchronous>, transform_indices = @transform_1, window_bounds = array<i64: 3, 16, 16>}]} {
    %c0 = arith.constant 0 : index
    %c0_0 = arith.constant 0 : index
    %0 = vector.load %arg1[%c0, %c0_0] : memref<16x16xf32, #tpu.memory_space<vmem>>, vector<16x16xf32>
    %1 = arith.truncf %0 : vector<16x16xf32> to vector<16x16xbf16>
    %c0_1 = arith.constant 0 : index
    %c0_2 = arith.constant 0 : index
    %c0_3 = arith.constant 0 : index
    %2 = vector.load %arg2[%c0_1, %c0_2, %c0_3] : memref<3x16x16xbf16, #tpu.memory_space<vmem>>, vector<1x16x16xbf16>
    %3 = vector.shape_cast %2 : vector<1x16x16xbf16> to vector<16x16xbf16>
    %4 = vector.shape_cast %1 : vector<16x16xbf16> to vector<1x16x16xbf16>
    tpu.vector_store %arg2[%c0_1, %c0_2, %c0_3], %4 {strides = array<i32>} : memref<3x16x16xbf16, #tpu.memory_space<vmem>>, vector<1x16x16xbf16>,
    %5 = tpu.iota {dimensions = array<i32: 0>} : vector<16x16xi32>
    %6 = tpu.iota {dimensions = array<i32: 1>} : vector<16x16xi32>
    %7 = arith.cmpi eq, %5, %6 : vector<16x16xi32>
    %8 = arith.extui %7 : vector<16x16xi1> to vector<16x16xi32>
    %9 = arith.sitofp %8 : vector<16x16xi32> to vector<16x16xf32>
    %c0_4 = arith.constant 0 : index
    %c0_5 = arith.constant 0 : index
    %c0_6 = arith.constant 0 : index
    %10 = vector.load %arg3[%c0_4, %c0_5, %c0_6] : memref<2x16x16xf32, #tpu.memory_space<vmem>>, vector<1x16x16xf32>
    %11 = vector.shape_cast %10 : vector<1x16x16xf32> to vector<16x16xf32>
    %12 = vector.shape_cast %9 : vector<16x16xf32> to vector<1x16x16xf32>
    tpu.vector_store %arg3[%c0_4, %c0_5, %c0_6], %12 {strides = array<i32>} : memref<2x16x16xf32, #tpu.memory_space<vmem>>, vector<1x16x16xf32>,
    %c0_7 = arith.constant 0 : index
    %c0_8 = arith.constant 0 : index
    %13 = vector.load %arg1[%c0_7, %c0_8] : memref<16x16xf32, #tpu.memory_space<vmem>>, vector<16x16xf32>
    %c1 = arith.constant 1 : index
    %c0_9 = arith.constant 0 : index
    %c0_10 = arith.constant 0 : index
    %14 = vector.load %arg3[%c1, %c0_9, %c0_10] : memref<2x16x16xf32, #tpu.memory_space<vmem>>, vector<1x16x16xf32>
    %15 = vector.shape_cast %14 : vector<1x16x16xf32> to vector<16x16xf32>
    %16 = vector.shape_cast %13 : vector<16x16xf32> to vector<1x16x16xf32>
    tpu.vector_store %arg3[%c1, %c0_9, %c0_10], %16 {strides = array<i32>} : memref<2x16x16xf32, #tpu.memory_space<vmem>>, vector<1x16x16xf32>,
    %c0_11 = arith.constant 0 : index
    %c0_12 = arith.constant 0 : index
    %17 = vector.load %arg1[%c0_11, %c0_12] : memref<16x16xf32, #tpu.memory_space<vmem>>, vector<16x16xf32>
    %c1_13 = arith.constant 1 : index
    %c0_14 = arith.constant 0 : index
    %c0_15 = arith.constant 0 : index
    %18 = vector.load %arg3[%c1_13, %c0_14, %c0_15] : memref<2x16x16xf32, #tpu.memory_space<vmem>>, vector<1x16x16xf32>
    %19 = vector.shape_cast %18 : vector<1x16x16xf32> to vector<16x16xf32>
    %cst = arith.constant dense<0.000000e+00> : vector<16x16xf32>
    %20 = tpu.matmul %17, %19, %cst {dimension_numbers = #tpu.dot_dimension_numbers<[1], [0], [0], [1], [0, 0, 1, 1], [], []>} : vector<16x16xf32>, vector<16x16xf32>, vector<16x16xf32> -> vector<16x16xf32>
    %cst_16 = arith.constant 2.000000e+00 : f32
    %21 = vector.broadcast %cst_16 : f32 to vector<16x16xf32>
    %22 = arith.mulf %21, %20 : vector<16x16xf32>
    %c0_17 = arith.constant 0 : index
    %c0_18 = arith.constant 0 : index
    %c0_19 = arith.constant 0 : index
    %23 = vector.load %arg3[%c0_17, %c0_18, %c0_19] : memref<2x16x16xf32, #tpu.memory_space<vmem>>, vector<1x16x16xf32>
    %24 = vector.shape_cast %23 : vector<1x16x16xf32> to vector<16x16xf32>
    %25 = arith.subf %22, %24 : vector<16x16xf32>
    %c0_20 = arith.constant 0 : index
    %c0_21 = arith.constant 0 : index
    %c0_22 = arith.constant 0 : index
    %26 = vector.load %arg3[%c0_20, %c0_21, %c0_22] : memref<2x16x16xf32, #tpu.memory_space<vmem>>, vector<1x16x16xf32>
    %27 = vector.shape_cast %26 : vector<1x16x16xf32> to vector<16x16xf32>
    %28 = vector.shape_cast %25 : vector<16x16xf32> to vector<1x16x16xf32>
    tpu.vector_store %arg3[%c0_20, %c0_21, %c0_22], %28 {strides = array<i32>} : memref<2x16x16xf32, #tpu.memory_space<vmem>>, vector<1x16x16xf32>,
    %29 = arith.truncf %25 : vector<16x16xf32> to vector<16x16xbf16>
    %c1_23 = arith.constant 1 : index
    %c0_24 = arith.constant 0 : index
    %c0_25 = arith.constant 0 : index
    %30 = vector.load %arg2[%c1_23, %c0_24, %c0_25] : memref<3x16x16xbf16, #tpu.memory_space<vmem>>, vector<1x16x16xbf16>
    %31 = vector.shape_cast %30 : vector<1x16x16xbf16> to vector<16x16xbf16>
    %32 = vector.shape_cast %29 : vector<16x16xbf16> to vector<1x16x16xbf16>
    tpu.vector_store %arg2[%c1_23, %c0_24, %c0_25], %32 {strides = array<i32>} : memref<3x16x16xbf16, #tpu.memory_space<vmem>>, vector<1x16x16xbf16>,
    %c0_26 = arith.constant 0 : index
    %c0_27 = arith.constant 0 : index
    %33 = vector.load %arg1[%c0_26, %c0_27] : memref<16x16xf32, #tpu.memory_space<vmem>>, vector<16x16xf32>
    %c0_28 = arith.constant 0 : index
    %c0_29 = arith.constant 0 : index
    %c0_30 = arith.constant 0 : index
    %34 = vector.load %arg3[%c0_28, %c0_29, %c0_30] : memref<2x16x16xf32, #tpu.memory_space<vmem>>, vector<1x16x16xf32>
    %35 = vector.shape_cast %34 : vector<1x16x16xf32> to vector<16x16xf32>
    %cst_31 = arith.constant dense<0.000000e+00> : vector<16x16xf32>
    %36 = tpu.matmul %33, %35, %cst_31 {dimension_numbers = #tpu.dot_dimension_numbers<[1], [0], [0], [1], [0, 0, 1, 1], [], []>} : vector<16x16xf32>, vector<16x16xf32>, vector<16x16xf32> -> vector<16x16xf32>
    %cst_32 = arith.constant 2.000000e+00 : f32
    %37 = vector.broadcast %cst_32 : f32 to vector<16x16xf32>
    %38 = arith.mulf %37, %36 : vector<16x16xf32>
    %c1_33 = arith.constant 1 : index
    %c0_34 = arith.constant 0 : index
    %c0_35 = arith.constant 0 : index
    %39 = vector.load %arg3[%c1_33, %c0_34, %c0_35] : memref<2x16x16xf32, #tpu.memory_space<vmem>>, vector<1x16x16xf32>
    %40 = vector.shape_cast %39 : vector<1x16x16xf32> to vector<16x16xf32>
    %41 = arith.subf %38, %40 : vector<16x16xf32>
    %c1_36 = arith.constant 1 : index
    %c0_37 = arith.constant 0 : index
    %c0_38 = arith.constant 0 : index
    %42 = vector.load %arg3[%c1_36, %c0_37, %c0_38] : memref<2x16x16xf32, #tpu.memory_space<vmem>>, vector<1x16x16xf32>
    %43 = vector.shape_cast %42 : vector<1x16x16xf32> to vector<16x16xf32>
    %44 = vector.shape_cast %41 : vector<16x16xf32> to vector<1x16x16xf32>
    tpu.vector_store %arg3[%c1_36, %c0_37, %c0_38], %44 {strides = array<i32>} : memref<2x16x16xf32, #tpu.memory_space<vmem>>, vector<1x16x16xf32>,
    %45 = arith.truncf %41 : vector<16x16xf32> to vector<16x16xbf16>
    %c2 = arith.constant 2 : index
    %c0_39 = arith.constant 0 : index
    %c0_40 = arith.constant 0 : index
    %46 = vector.load %arg2[%c2, %c0_39, %c0_40] : memref<3x16x16xbf16, #tpu.memory_space<vmem>>, vector<1x16x16xbf16>
    %47 = vector.shape_cast %46 : vector<1x16x16xbf16> to vector<16x16xbf16>
    %48 = vector.shape_cast %45 : vector<16x16xbf16> to vector<1x16x16xbf16>
    tpu.vector_store %arg2[%c2, %c0_39, %c0_40], %48 {strides = array<i32>} : memref<3x16x16xbf16, #tpu.memory_space<vmem>>, vector<1x16x16xbf16>,
    return
  }
  func.func @transform_0(%arg0: i32) -> (i32, i32) {
    %c0_i32 = arith.constant 0 : i32
    %c0_i32_0 = arith.constant 0 : i32
    %c0_i32_1 = arith.constant 0 : i32
    return %c0_i32, %c0_i32_0 : i32, i32
  }
  func.func @transform_1(%arg0: i32) -> (i32, i32, i32) {
    %c0_i32 = arith.constant 0 : i32
    %c0_i32_0 = arith.constant 0 : i32
    %c0_i32_1 = arith.constant 0 : i32
    %c0_i32_2 = arith.constant 0 : i32
    return %c0_i32, %c0_i32_0, %c0_i32_1 : i32, i32, i32
  }
}

</mosaic_0001>

<llo_original>
// kernel: tpu_custom_call.1
$region0: #{tpu_custom_call.1}
  #allocation0 [shape = 'u32[]', space=smem, size = 0x4, offset = 0x4, fixed_abs, tag = 'smem constant byte address 0x4 - core index']
  #allocation1 [shape = 'u32[144,128]{1,0:T(1,128)}', space=vmem, size = 0x12000, scoped, tag = 'internal scratch']
  #allocation2 [shape = 'f32[2,16,16]{2,1,0:T(8,128)}', space=vmem, size = 0x4000, scoped, tag = 'scratch operand']
  %s0 = inlined_call_operand.hbm [shape: f32[16,16], index: 0, kind: input, shape index: {}]
  %s1 = inlined_call_operand.hbm [shape: bf16[3,16,16], index: 1, kind: output, shape index: {}]
  %s2 = sld [smem:[#allocation0]]
  $region18: #{tpu_custom_call.1} parent=0
    _
  %s4 = ssub.s32 1, %s2
  %s5 = scalar_select 0, %s4, %s2
  $region1: #{tpu_custom_call.1} parent=0
    #allocation3 [shape = 'u8[8192]{0}', space=vmem, size = 0x2000, scoped, tag = 'input window, operand 0, single buffered']
    #allocation4 [shape = 's32[1]{0}', space=sflag, size = 0x4, scoped, tag = 'scoped memory for tpu_custom_call.1']
    #allocation5 [shape = 's32[1]{0}', space=sflag, size = 0x4, scoped, tag = 'scoped memory for tpu_custom_call.1']
    #allocation6 [shape = 'u8[12288]{0}', space=vmem, size = 0x3000, scoped, tag = 'output window, operand 0, single buffered']
    %6 = vsyncpa [#allocation4], 0
    %7 = vsyncpa [#allocation5], 0
    // Predicated region
    $region2: #{tpu_custom_call.1} parent=1 // pred_check
      _
    $region3: #{tpu_custom_call.1} parent=1 // pred_check_branch
      %9 = sbr.rel (0) target = $region5
    $region4: #{tpu_custom_call.1} parent=1 // pred_region
      %s11 = ssub.s32 256, 256
      %12 = vsyncadd [#allocation4], %s11
      %s13 = sshll.u32 [#allocation3], 4
      %s14 = int_to_ptr.vmem [resolvable:$true] %s13
      %19 = dma.hbm_to_vmem [thread:$0]  %s0, 256, %s14, [#allocation4], 128, 128, 8
    $region5: #{tpu_custom_call.1} parent=1 // pred_fallthru
      _
    // Predicated region
    $region6: #{tpu_custom_call.1} parent=1 // pred_check
      _
    $region7: #{tpu_custom_call.1} parent=1 // pred_check_branch
      %21 = sbr.rel (0) target = $region9
    $region8: #{tpu_custom_call.1} parent=1 // pred_region
      %22 = dma.done [#allocation4], 256
    $region9: #{tpu_custom_call.1} parent=1 // pred_fallthru
      _
    %v23 = vld [vmem:[#allocation3] sm:$0xff]
    %v24 = vld [vmem:[#allocation3 + $0x8] sm:$0xff]
    %v25 = vpack.c.bf16 %v24, %v23
    %v27 = vunpack.c.l.b16 %v25
    %v28 = vunpack.c.h.b16 %v25
    %v29 = vpack.c.b16 %v27, %v27
    %v30 = vpack.c.b16 %v28, %v28
    %vm33 = vcmask 125952
    %34 = vst.msk [vmem:[#allocation6] sm:$0xf] %vm33, %v29
    %35 = vst.msk [vmem:[#allocation6 + $0x4] sm:$0xf] %vm33, %v30
    %v36 = vlaneseq
    %v37 = vshrl.u32 %v36, 7
    %v38 = vadd.s32 %v37, 8
    %v39 = vlaneseq
    %v40 = vand.u32 %v39, 127
    %vm41 = vcmp.eq.s32.totalorder %v37, %v40
    %vm42 = vcmp.eq.s32.totalorder %v38, %v40
    %v43 = vsel %vm41, 1, 0
    %v44 = vsel %vm42, 1, 0
    %v45 = vcvt.s32.f32 %v43
    %v46 = vcvt.s32.f32 %v44
    %vm47 = vcmask 130048
    %48 = vst.msk [vmem:[#allocation2] sm:$0xff] %vm47, %v45
    %49 = vst.msk [vmem:[#allocation2 + $0x8] sm:$0xff] %vm47, %v46
    %v50 = vld [vmem:[#allocation3] sm:$0xff]
    %v51 = vld [vmem:[#allocation3 + $0x8] sm:$0xff]
    %s52 = scalar_lea.vmem [#allocation2], 16
    %53 = vst.msk [vmem:[%s52] sm:$0xff] %vm47, %v50
    %54 = vst.msk [vmem:[%s52 + $0x8] sm:$0xff] %vm47, %v51
    %v55 = vld [vmem:[#allocation3] sm:$0xff]
    %v56 = vld [vmem:[#allocation3 + $0x8] sm:$0xff]
    %v57 = vld [vmem:[%s52] sm:$0xff]
    %v58 = vld [vmem:[%s52 + $0x8] sm:$0xff]
    %v60 = vsel %vm47, %v55, 0
    %v63 = vsel %vm47, %v56, 0
    %65 = vmatprep.subr.mxu0 0.0
    %66 = vmatpush1.msra.mxu0 %v57
    %67 = vmatprep.subr.mxu0 0.0
    %68 = vmatpush1.msra.mxu0 %v58
    %69 = vmatprep.subr.mxu0 0.0
    %70 = vmatpush1.msra.mxu0 0.0
    %71 = vmatprep.subr.mxu0 0.0
    %72 = vmatpush1.msra.mxu0 0.0
    %73 = vmatprep.subr.mxu0 0.0
    %74 = vmatpush1.msra.mxu0 0.0
    %75 = vmatprep.subr.mxu0 0.0
    %76 = vmatpush1.msra.mxu0 0.0
    %77 = vmatprep.subr.mxu0 0.0
    %78 = vmatpush1.msra.mxu0 0.0
    %79 = vmatprep.subr.mxu0 0.0
    %80 = vmatpush1.msra.mxu0 0.0
    %81 = vmatprep.subr.mxu0 0.0
    %82 = vmatpush1.msra.mxu0 0.0
    %83 = vmatprep.subr.mxu0 0.0
    %84 = vmatpush1.msra.mxu0 0.0
    %85 = vmatprep.subr.mxu0 0.0
    %86 = vmatpush1.msra.mxu0 0.0
    %87 = vmatprep.subr.mxu0 0.0
    %88 = vmatpush1.msra.mxu0 0.0
    %89 = vmatprep.subr.mxu0 0.0
    %90 = vmatpush1.msra.mxu0 0.0
    %91 = vmatprep.subr.mxu0 0.0
    %92 = vmatpush1.msra.mxu0 0.0
    %93 = vmatprep.subr.mxu0 0.0
    %94 = vmatpush1.msra.mxu0 0.0
    %95 = vmatprep.subr.mxu0 0.0
    %96 = vmatpush1.msra.mxu0 0.0
    %97 = vmatprep.subr.mxu0 0.0
    %98 = vmatpush1.msra.mxu0 0.0
    %99 = vmatprep.subr.mxu0 0.0
    %100 = vmatpush1.msra.mxu0 0.0
    %101 = vmatprep.subr.mxu0 0.0
    %102 = vmatpush1.msra.mxu0 0.0
    %103 = vmatprep.subr.mxu0 0.0
    %104 = vmatpush1.msra.mxu0 0.0
    %105 = vmatprep.subr.mxu0 0.0
    %106 = vmatpush1.msra.mxu0 0.0
    %107 = vmatprep.subr.mxu0 0.0
    %108 = vmatpush1.msra.mxu0 0.0
    %109 = vmatprep.subr.mxu0 0.0
    %110 = vmatpush1.msra.mxu0 0.0
    %111 = vmatprep.subr.mxu0 0.0
    %112 = vmatpush1.msra.mxu0 0.0
    %113 = vmatprep.subr.mxu0 0.0
    %114 = vmatpush1.msra.mxu0 0.0
    %115 = vmatprep.subr.mxu0 0.0
    %116 = vmatpush1.msra.mxu0 0.0
    %117 = vmatprep.subr.mxu0 0.0
    %118 = vmatpush1.msra.mxu0 0.0
    %119 = vmatprep.subr.mxu0 0.0
    %120 = vmatpush1.msra.mxu0 0.0
    %121 = vmatprep.subr.mxu0 0.0
    %122 = vmatpush1.msra.mxu0 0.0
    %123 = vmatprep.subr.mxu0 0.0
    %124 = vmatpush1.msra.mxu0 0.0
    %125 = vmatprep.subr.mxu0 0.0
    %126 = vmatpush1.msra.mxu0 0.0
    %127 = vmatprep.subr.mxu0 0.0
    %128 = vmatpush1.msra.mxu0 0.0
    %129 = vmatprep.mubr.f32.mxu0 0.0
    %130 = vmatmul.mubr.f32.gmra.mrb[0].mxu0 %v60
    %v131 = vpop.f32.mrb[0].mxu0
    %v132 = vadd.f32 0.0, %v131
    %v133 = vpop.f32.mrb[0].mxu0
    %134 = vmatprep.mubr.f32.mxu0 0.0
    %135 = vmatmul.mubr.f32.gmra.mrb[0].mxu0 %v63
    %v136 = vpop.f32.mrb[0].mxu0
    %v137 = vadd.f32 0.0, %v136
    %v138 = vpop.f32.mrb[0].mxu0
    %139 = vdwg.mxu0
    %v140 = vmul.f32 %v132, 2.0
    %v141 = vmul.f32 %v137, 2.0
    %v142 = vld [vmem:[#allocation2] sm:$0xff]
    %v143 = vld [vmem:[#allocation2 + $0x8] sm:$0xff]
    %v144 = vsub.f32 %v140, %v142
    %v145 = vsub.f32 %v141, %v143
    %146 = vst.msk [vmem:[#allocation2] sm:$0xff] %vm47, %v144
    %147 = vst.msk [vmem:[#allocation2 + $0x8] sm:$0xff] %vm47, %v145
    %v148 = vpack.c.bf16 %v145, %v144
    %v150 = vunpack.c.l.b16 %v148
    %v151 = vunpack.c.h.b16 %v148
    %v152 = vpack.c.b16 %v150, %v150
    %v153 = vpack.c.b16 %v151, %v151
    %s156 = scalar_lea.vmem [#allocation6], 8
    %157 = vst.msk [vmem:[%s156] sm:$0xf] %vm33, %v152
    %158 = vst.msk [vmem:[%s156 + $0x4] sm:$0xf] %vm33, %v153
    %v159 = vld [vmem:[#allocation3] sm:$0xff]
    %v160 = vld [vmem:[#allocation3 + $0x8] sm:$0xff]
    %v161 = vld [vmem:[#allocation2] sm:$0xff]
    %v162 = vld [vmem:[#allocation2 + $0x8] sm:$0xff]
    %v164 = vsel %vm47, %v159, 0
    %v167 = vsel %vm47, %v160, 0
    %169 = vmatprep.subr.mxu0 0.0
    %170 = vmatpush1.msra.mxu0 %v161
    %171 = vmatprep.subr.mxu0 0.0
    %172 = vmatpush1.msra.mxu0 %v162
    %173 = vmatprep.subr.mxu0 0.0
    %174 = vmatpush1.msra.mxu0 0.0
    %175 = vmatprep.subr.mxu0 0.0
    %176 = vmatpush1.msra.mxu0 0.0
    %177 = vmatprep.subr.mxu0 0.0
    %178 = vmatpush1.msra.mxu0 0.0
    %179 = vmatprep.subr.mxu0 0.0
    %180 = vmatpush1.msra.mxu0 0.0
    %181 = vmatprep.subr.mxu0 0.0
    %182 = vmatpush1.msra.mxu0 0.0
    %183 = vmatprep.subr.mxu0 0.0
    %184 = vmatpush1.msra.mxu0 0.0
    %185 = vmatprep.subr.mxu0 0.0
    %186 = vmatpush1.msra.mxu0 0.0
    %187 = vmatprep.subr.mxu0 0.0
    %188 = vmatpush1.msra.mxu0 0.0
    %189 = vmatprep.subr.mxu0 0.0
    %190 = vmatpush1.msra.mxu0 0.0
    %191 = vmatprep.subr.mxu0 0.0
    %192 = vmatpush1.msra.mxu0 0.0
    %193 = vmatprep.subr.mxu0 0.0
    %194 = vmatpush1.msra.mxu0 0.0
    %195 = vmatprep.subr.mxu0 0.0
    %196 = vmatpush1.msra.mxu0 0.0
    %197 = vmatprep.subr.mxu0 0.0
    %198 = vmatpush1.msra.mxu0 0.0
    %199 = vmatprep.subr.mxu0 0.0
    %200 = vmatpush1.msra.mxu0 0.0
    %201 = vmatprep.subr.mxu0 0.0
    %202 = vmatpush1.msra.mxu0 0.0
    %203 = vmatprep.subr.mxu0 0.0
    %204 = vmatpush1.msra.mxu0 0.0
    %205 = vmatprep.subr.mxu0 0.0
    %206 = vmatpush1.msra.mxu0 0.0
    %207 = vmatprep.subr.mxu0 0.0
    %208 = vmatpush1.msra.mxu0 0.0
    %209 = vmatprep.subr.mxu0 0.0
    %210 = vmatpush1.msra.mxu0 0.0
    %211 = vmatprep.subr.mxu0 0.0
    %212 = vmatpush1.msra.mxu0 0.0
    %213 = vmatprep.subr.mxu0 0.0
    %214 = vmatpush1.msra.mxu0 0.0
    %215 = vmatprep.subr.mxu0 0.0
    %216 = vmatpush1.msra.mxu0 0.0
    %217 = vmatprep.subr.mxu0 0.0
    %218 = vmatpush1.msra.mxu0 0.0
    %219 = vmatprep.subr.mxu0 0.0
    %220 = vmatpush1.msra.mxu0 0.0
    %221 = vmatprep.subr.mxu0 0.0
    %222 = vmatpush1.msra.mxu0 0.0
    %223 = vmatprep.subr.mxu0 0.0
    %224 = vmatpush1.msra.mxu0 0.0
    %225 = vmatprep.subr.mxu0 0.0
    %226 = vmatpush1.msra.mxu0 0.0
    %227 = vmatprep.subr.mxu0 0.0
    %228 = vmatpush1.msra.mxu0 0.0
    %229 = vmatprep.subr.mxu0 0.0
    %230 = vmatpush1.msra.mxu0 0.0
    %231 = vmatprep.subr.mxu0 0.0
    %232 = vmatpush1.msra.mxu0 0.0
    %233 = vmatprep.mubr.f32.mxu0 0.0
    %234 = vmatmul.mubr.f32.gmra.mrb[0].mxu0 %v164
    %v235 = vpop.f32.mrb[0].mxu0
    %v236 = vadd.f32 0.0, %v235
    %v237 = vpop.f32.mrb[0].mxu0
    %238 = vmatprep.mubr.f32.mxu0 0.0
    %239 = vmatmul.mubr.f32.gmra.mrb[0].mxu0 %v167
    %v240 = vpop.f32.mrb[0].mxu0
    %v241 = vadd.f32 0.0, %v240
    %v242 = vpop.f32.mrb[0].mxu0
    %243 = vdwg.mxu0
    %v244 = vmul.f32 %v236, 2.0
    %v245 = vmul.f32 %v241, 2.0
    %v246 = vld [vmem:[%s52] sm:$0xff]
    %v247 = vld [vmem:[%s52 + $0x8] sm:$0xff]
    %v248 = vsub.f32 %v244, %v246
    %v249 = vsub.f32 %v245, %v247
    %250 = vst.msk [vmem:[%s52] sm:$0xff] %vm47, %v248
    %251 = vst.msk [vmem:[%s52 + $0x8] sm:$0xff] %vm47, %v249
    %v252 = vpack.c.bf16 %v249, %v248
    %v254 = vunpack.c.l.b16 %v252
    %v255 = vunpack.c.h.b16 %v252
    %v256 = vpack.c.b16 %v254, %v254
    %v257 = vpack.c.b16 %v255, %v255
    %s260 = scalar_lea.vmem [#allocation6], 16
    %261 = vst.msk [vmem:[%s260] sm:$0xf] %vm33, %v256
    %262 = vst.msk [vmem:[%s260 + $0x4] sm:$0xf] %vm33, %v257
    // Predicated region
    $region10: #{tpu_custom_call.1} parent=1 // pred_check
      _
    $region11: #{tpu_custom_call.1} parent=1 // pred_check_branch
      %264 = sbr.rel (0) target = $region13
    $region12: #{tpu_custom_call.1} parent=1 // pred_region
      %s266 = ssub.s32 384, 384
      %267 = vsyncadd [#allocation5], %s266
      %s268 = sshll.u32 [#allocation6], 4
      %s269 = int_to_ptr.vmem [resolvable:$true] %s268
      %274 = dma.vmem_to_hbm [thread:$0]  %s269, 384, %s1, [#allocation5], 64, 64, 4
    $region13: #{tpu_custom_call.1} parent=1 // pred_fallthru
      _
    // Predicated region
    $region14: #{tpu_custom_call.1} parent=1 // pred_check
      _
    $region15: #{tpu_custom_call.1} parent=1 // pred_check_branch
      %276 = sbr.rel (0) target = $region17
    $region16: #{tpu_custom_call.1} parent=1 // pred_region
      %277 = dma.done [#allocation5], 384
    $region17: #{tpu_custom_call.1} parent=1 // pred_fallthru
      _
    %278 = vsyncpa [#allocation4], 1
    %279 = vsyncpa [#allocation5], 1

</llo_original>
